<compile_context>
chip_gen: v7x
topology: tpu7x:2x2x1
jax: 0.10.0
libtpu: 0.0.40
codegen_flags: <defaults>
</compile_context>

<pallas_src>
import jax
import jax.numpy as jnp
from jax.experimental import pallas as pl
from jax.experimental.pallas import tpu as pltpu


def qnetwork_kernel(x_ref, w1_ref, b1_ref, w2_ref, b2_ref, w3_ref, b3_ref, o_ref):
    # x tile is bf16; matmuls run bf16 on the MXU with f32 accumulation.
    x = x_ref[...]

    # fc1 + ReLU (bias add / ReLU in f32, cast back to bf16 for the next MXU pass)
    h1 = jnp.dot(x, w1_ref[...], preferred_element_type=jnp.float32) + b1_ref[...]
    h1 = jnp.maximum(h1, 0.0).astype(jnp.bfloat16)

    # fc2 + ReLU
    h2 = jnp.dot(h1, w2_ref[...], preferred_element_type=jnp.float32) + b2_ref[...]
    h2 = jnp.maximum(h2, 0.0).astype(jnp.bfloat16)

    # fc3 (no activation); output last dim = nvec_u (unpadded, masked store)
    out = jnp.dot(h2, w3_ref[...], preferred_element_type=jnp.float32) + b3_ref[...]
    o_ref[...] = out.astype(o_ref.dtype)


def _round_up(n, m):
    return ((n + m - 1) // m) * m


def _choose_tb(B):
    """Batch tile: multiple of 16 (bf16 sublane packing), capped at 8192 rows
    (amortizes ~0.35us/step grid overhead; a few MiB of VMEM at hidden=64), and
    for large batches at least 2 (>=4 when possible) grid steps so v7x's two
    TensorCores both get work via the "parallel" batch axis."""
    b16 = _round_up(max(B, 1), 16)
    if b16 <= 16:
        return b16
    steps = 2 if b16 < 128 else 4
    steps = max(steps, pl.cdiv(b16, 8192))
    return _round_up(pl.cdiv(b16, steps), 16)


def qnetwork_forward(x, params, *, tb=None):
    """x: (B, nvec_s), ideally bf16 (f32 accepted, cast once).
    params: dict of w1,b1,w2,b2,w3,b3 with weights in (in, out) layout."""
    w1, b1 = params["w1"], params["b1"]
    w2, b2 = params["w2"], params["b2"]
    w3, b3 = params["w3"], params["b3"]

    B, nvec_s = x.shape
    hidden = w1.shape[1]
    nvec_u = w3.shape[1]

    if tb is None:
        tb = _choose_tb(B)
    else:
        tb = _round_up(int(tb), 16)  # enforce bf16 sublane granule
    B_pad = _round_up(B, tb)

    # Streamed activation in bf16; no feature padding. Only pad batch rows when
    # B is not a tile multiple (padded rows are sliced off at the end).
    xk = x if x.dtype == jnp.bfloat16 else x.astype(jnp.bfloat16)
    if B_pad != B:
        xk = jnp.pad(xk, ((0, B_pad - B), (0, 0)))

    # Resident operands: weights bf16 for the MXU, biases f32 for the VPU epilogue.
    w1k = w1.astype(jnp.bfloat16)
    w2k = w2.astype(jnp.bfloat16)
    w3k = w3.astype(jnp.bfloat16)
    b1k = b1.reshape(1, hidden).astype(jnp.float32)
    b2k = b2.reshape(1, hidden).astype(jnp.float32)
    b3k = b3.reshape(1, nvec_u).astype(jnp.float32)

    # Full-array blocks with constant index_map -> DMA'd once, VMEM-resident
    # across all batch-grid steps.
    resident = lambda a: pl.BlockSpec(a.shape, lambda i: (0,) * a.ndim)

    out_p = pl.pallas_call(
        qnetwork_kernel,
        out_shape=jax.ShapeDtypeStruct((B_pad, nvec_u), jnp.float32),
        grid=(B_pad // tb,),
        in_specs=[
            pl.BlockSpec((tb, nvec_s), lambda i: (i, 0)),   # x: tiled over batch
            resident(w1k), resident(b1k),
            resident(w2k), resident(b2k),
            resident(w3k), resident(b3k),
        ],
        out_specs=pl.BlockSpec((tb, nvec_u), lambda i: (i, 0)),
        compiler_params=pltpu.CompilerParams(
            dimension_semantics=("parallel",),        # megacore-shard batch on v7x
            vmem_limit_bytes=32 * 1024 * 1024,        # explicit (v5e default 16 MiB)
        ),
    )(xk, w1k, b1k, w2k, b2k, w3k, b3k)

    return out_p if B_pad == B else out_p[:B]


def init_qnetwork_params(key, nvec_s, nvec_u, hidden=64):
    """Deterministic init mimicking torch nn.Linear (uniform +-1/sqrt(fan_in))."""
    def linear(key, fan_in, fan_out):
        kw, kb = jax.random.split(key)
        bound = 1.0 / jnp.sqrt(jnp.float32(fan_in))
        # stored as (in, out) so the kernel computes x @ W
        w = jax.random.uniform(kw, (fan_in, fan_out), jnp.float32, -bound, bound)
        b = jax.random.uniform(kb, (1, fan_out), jnp.float32, -bound, bound)
        return w, b

    k1, k2, k3 = jax.random.split(key, 3)
    w1, b1 = linear(k1, nvec_s, hidden)
    w2, b2 = linear(k2, hidden, hidden)
    w3, b3 = linear(k3, hidden, nvec_u)
    return {"w1": w1, "b1": b1, "w2": w2, "b2": b2, "w3": w3, "b3": b3}


def qnetwork_ref(x, params):
    """Pure-JAX f32 reference for the correctness check."""
    x = x.astype(jnp.float32)
    h = jnp.maximum(x @ params["w1"] + params["b1"], 0.0)
    h = jnp.maximum(h @ params["w2"] + params["b2"], 0.0)
    return h @ params["w3"] + params["b3"]


if __name__ == "__main__":
    nvec_s, nvec_u, batch = 32, 16, 8

    key = jax.random.PRNGKey(0)
    kx, kp = jax.random.split(key)
    # Produce x directly in bf16 (cast where it is produced -> no extra wrapper pass).
    x = jax.random.normal(kx, (batch, nvec_s), jnp.float32).astype(jnp.bfloat16)
    params = init_qnetwork_params(kp, nvec_s, nvec_u)

    out = qnetwork_forward(x, params)
    out = jax.block_until_ready(out)

    ref = qnetwork_ref(x, params)
    assert out.shape == (batch, nvec_u)
    # bf16 MXU operands with f32 accumulation -> loosened tolerance vs pure-f32 ref.
    assert jnp.allclose(out, ref, atol=5e-2, rtol=5e-2), float(jnp.max(jnp.abs(out - ref)))

    print("KERNEL_OK")
</pallas_src>

<mosaic_0001>
module attributes {stable_mosaic.version = 11 : i64} {
  func.func @qnetwork_kernel(%arg0: i32, %arg1: memref<16x32xbf16, #tpu.memory_space<vmem>>, %arg2: memref<32x64xbf16, #tpu.memory_space<vmem>>, %arg3: memref<1x64xf32, #tpu.memory_space<vmem>>, %arg4: memref<64x64xbf16, #tpu.memory_space<vmem>>, %arg5: memref<1x64xf32, #tpu.memory_space<vmem>>, %arg6: memref<64x16xbf16, #tpu.memory_space<vmem>>, %arg7: memref<1x16xf32, #tpu.memory_space<vmem>>, %arg8: memref<16x16xf32, #tpu.memory_space<vmem>>) attributes {dimension_semantics = [#tpu.dimension_semantics<parallel>], iteration_bounds = array<i64: 1>, scalar_prefetch = 0 : i64, scratch_operands = 0 : i64, tpu.core_type = #tpu.core_type<tc>, window_params = [{transform_indices = @transform_0, window_bounds = array<i64: 16, 32>}, {pipeline_mode = #tpu.pipeline_mode<synchronous>, transform_indices = @transform_1, window_bounds = array<i64: 32, 64>}, {pipeline_mode = #tpu.pipeline_mode<synchronous>, transform_indices = @transform_2, window_bounds = array<i64: 1, 64>}, {pipeline_mode = #tpu.pipeline_mode<synchronous>, transform_indices = @transform_3, window_bounds = array<i64: 64, 64>}, {pipeline_mode = #tpu.pipeline_mode<synchronous>, transform_indices = @transform_4, window_bounds = array<i64: 1, 64>}, {pipeline_mode = #tpu.pipeline_mode<synchronous>, transform_indices = @transform_5, window_bounds = array<i64: 64, 16>}, {pipeline_mode = #tpu.pipeline_mode<synchronous>, transform_indices = @transform_6, window_bounds = array<i64: 1, 16>}, {transform_indices = @transform_7, window_bounds = array<i64: 16, 16>}]} {
    %c0 = arith.constant 0 : index
    %c0_0 = arith.constant 0 : index
    %0 = vector.load %arg1[%c0, %c0_0] : memref<16x32xbf16, #tpu.memory_space<vmem>>, vector<16x32xbf16>
    %c0_1 = arith.constant 0 : index
    %c0_2 = arith.constant 0 : index
    %1 = vector.load %arg2[%c0_1, %c0_2] : memref<32x64xbf16, #tpu.memory_space<vmem>>, vector<32x64xbf16>
    %cst = arith.constant dense<0.000000e+00> : vector<16x64xf32>
    %2 = tpu.matmul %0, %1, %cst {dimension_numbers = #tpu.dot_dimension_numbers<[1], [0], [0], [1], [0, 0, 1, 1], [], []>} : vector<16x32xbf16>, vector<32x64xbf16>, vector<16x64xf32> -> vector<16x64xf32>
    %c0_3 = arith.constant 0 : index
    %c0_4 = arith.constant 0 : index
    %3 = vector.load %arg3[%c0_3, %c0_4] : memref<1x64xf32, #tpu.memory_space<vmem>>, vector<1x64xf32>
    %4 = vector.broadcast %3 : vector<1x64xf32> to vector<16x64xf32>
    %5 = arith.addf %2, %4 : vector<16x64xf32>
    %cst_5 = arith.constant 0.000000e+00 : f32
    %6 = vector.broadcast %cst_5 : f32 to vector<16x64xf32>
    %7 = arith.maximumf %5, %6 : vector<16x64xf32>
    %8 = arith.truncf %7 : vector<16x64xf32> to vector<16x64xbf16>
    %c0_6 = arith.constant 0 : index
    %c0_7 = arith.constant 0 : index
    %9 = vector.load %arg4[%c0_6, %c0_7] : memref<64x64xbf16, #tpu.memory_space<vmem>>, vector<64x64xbf16>
    %cst_8 = arith.constant dense<0.000000e+00> : vector<16x64xf32>
    %10 = tpu.matmul %8, %9, %cst_8 {dimension_numbers = #tpu.dot_dimension_numbers<[1], [0], [0], [1], [0, 0, 1, 1], [], []>} : vector<16x64xbf16>, vector<64x64xbf16>, vector<16x64xf32> -> vector<16x64xf32>
    %c0_9 = arith.constant 0 : index
    %c0_10 = arith.constant 0 : index
    %11 = vector.load %arg5[%c0_9, %c0_10] : memref<1x64xf32, #tpu.memory_space<vmem>>, vector<1x64xf32>
    %12 = vector.broadcast %11 : vector<1x64xf32> to vector<16x64xf32>
    %13 = arith.addf %10, %12 : vector<16x64xf32>
    %cst_11 = arith.constant 0.000000e+00 : f32
    %14 = vector.broadcast %cst_11 : f32 to vector<16x64xf32>
    %15 = arith.maximumf %13, %14 : vector<16x64xf32>
    %16 = arith.truncf %15 : vector<16x64xf32> to vector<16x64xbf16>
    %c0_12 = arith.constant 0 : index
    %c0_13 = arith.constant 0 : index
    %17 = vector.load %arg6[%c0_12, %c0_13] : memref<64x16xbf16, #tpu.memory_space<vmem>>, vector<64x16xbf16>
    %cst_14 = arith.constant dense<0.000000e+00> : vector<16x16xf32>
    %18 = tpu.matmul %16, %17, %cst_14 {dimension_numbers = #tpu.dot_dimension_numbers<[1], [0], [0], [1], [0, 0, 1, 1], [], []>} : vector<16x64xbf16>, vector<64x16xbf16>, vector<16x16xf32> -> vector<16x16xf32>
    %c0_15 = arith.constant 0 : index
    %c0_16 = arith.constant 0 : index
    %19 = vector.load %arg7[%c0_15, %c0_16] : memref<1x16xf32, #tpu.memory_space<vmem>>, vector<1x16xf32>
    %20 = vector.broadcast %19 : vector<1x16xf32> to vector<16x16xf32>
    %21 = arith.addf %18, %20 : vector<16x16xf32>
    %c0_17 = arith.constant 0 : index
    %c0_18 = arith.constant 0 : index
    %22 = vector.load %arg8[%c0_17, %c0_18] : memref<16x16xf32, #tpu.memory_space<vmem>>, vector<16x16xf32>
    tpu.vector_store %arg8[%c0_17, %c0_18], %21 {strides = array<i32>} : memref<16x16xf32, #tpu.memory_space<vmem>>, vector<16x16xf32>,
    return
  }
  func.func @transform_0(%arg0: i32) -> (i32, i32) {
    %c0_i32 = arith.constant 0 : i32
    %c0_i32_0 = arith.constant 0 : i32
    return %arg0, %c0_i32 : i32, i32
  }
  func.func @transform_1(%arg0: i32) -> (i32, i32) {
    %c0_i32 = arith.constant 0 : i32
    %c0_i32_0 = arith.constant 0 : i32
    %c0_i32_1 = arith.constant 0 : i32
    return %c0_i32, %c0_i32_0 : i32, i32
  }
  func.func @transform_2(%arg0: i32) -> (i32, i32) {
    %c0_i32 = arith.constant 0 : i32
    %c0_i32_0 = arith.constant 0 : i32
    %c0_i32_1 = arith.constant 0 : i32
    return %c0_i32, %c0_i32_0 : i32, i32
  }
  func.func @transform_3(%arg0: i32) -> (i32, i32) {
    %c0_i32 = arith.constant 0 : i32
    %c0_i32_0 = arith.constant 0 : i32
    %c0_i32_1 = arith.constant 0 : i32
    return %c0_i32, %c0_i32_0 : i32, i32
  }
  func.func @transform_4(%arg0: i32) -> (i32, i32) {
    %c0_i32 = arith.constant 0 : i32
    %c0_i32_0 = arith.constant 0 : i32
    %c0_i32_1 = arith.constant 0 : i32
    return %c0_i32, %c0_i32_0 : i32, i32
  }
  func.func @transform_5(%arg0: i32) -> (i32, i32) {
    %c0_i32 = arith.constant 0 : i32
    %c0_i32_0 = arith.constant 0 : i32
    %c0_i32_1 = arith.constant 0 : i32
    return %c0_i32, %c0_i32_0 : i32, i32
  }
  func.func @transform_6(%arg0: i32) -> (i32, i32) {
    %c0_i32 = arith.constant 0 : i32
    %c0_i32_0 = arith.constant 0 : i32
    %c0_i32_1 = arith.constant 0 : i32
    return %c0_i32, %c0_i32_0 : i32, i32
  }
  func.func @transform_7(%arg0: i32) -> (i32, i32) {
    %c0_i32 = arith.constant 0 : i32
    %c0_i32_0 = arith.constant 0 : i32
    return %arg0, %c0_i32 : i32, i32
  }
}

</mosaic_0001>

<llo_original>
// kernel: tpu_custom_call.1
$region0: #{tpu_custom_call.1}
  #allocation0 [shape = 'u32[]', space=smem, size = 0x4, offset = 0x4, fixed_abs, tag = 'smem constant byte address 0x4 - core index']
  #allocation1 [shape = 'u32[144,128]{1,0:T(1,128)}', space=vmem, size = 0x12000, scoped, tag = 'internal scratch']
  %s0 = inlined_call_operand.hbm [shape: bf16[16,32], index: 0, kind: input, shape index: {}]
  %s1 = inlined_call_operand.vmem [shape: bf16[32,64], index: 1, kind: input, shape index: {}]
  %s2 = inlined_call_operand.vmem [shape: f32[1,64], index: 2, kind: input, shape index: {}]
  %s3 = inlined_call_operand.vmem [shape: bf16[64,64], index: 3, kind: input, shape index: {}]
  %s4 = inlined_call_operand.vmem [shape: f32[1,64], index: 4, kind: input, shape index: {}]
  %s5 = inlined_call_operand.vmem [shape: bf16[64,16], index: 5, kind: input, shape index: {}]
  %s6 = inlined_call_operand.vmem [shape: f32[1,16], index: 6, kind: input, shape index: {}]
  %s7 = inlined_call_operand.hbm [shape: f32[16,16], index: 7, kind: output, shape index: {}]
  %s8 = sld [smem:[#allocation0]]
  $region42: #{tpu_custom_call.1} parent=0
    _
  %s10 = ssub.s32 1, %s8
  %s11 = scalar_select 0, %s10, %s8
  $region1: #{tpu_custom_call.1} parent=0
    #allocation2 [shape = 'u8[4096]{0}', space=vmem, size = 0x1000, scoped, tag = 'input window, operand 0, single buffered']
    #allocation3 [shape = 's32[1]{0}', space=sflag, size = 0x4, scoped, tag = 'scoped memory for tpu_custom_call.1']
    #allocation4 [shape = 's32[1]{0}', space=sflag, size = 0x4, scoped, tag = 'scoped memory for tpu_custom_call.1']
    #allocation5 [shape = 'u8[8192]{0}', space=vmem, size = 0x2000, scoped, tag = 'output window, operand 0, single buffered']
    %12 = vsyncpa [#allocation3], 0
    %13 = vsyncpa [#allocation4], 0
    // Predicated region
    $region2: #{tpu_custom_call.1} parent=1 // pred_check
      _
    $region3: #{tpu_custom_call.1} parent=1 // pred_check_branch
      %15 = sbr.rel (0) target = $region5
    $region4: #{tpu_custom_call.1} parent=1 // pred_region
      %s17 = ssub.s32 128, 128
      %18 = vsyncadd [#allocation3], %s17
      %s19 = sshll.u32 [#allocation2], 4
      %s20 = int_to_ptr.vmem [resolvable:$true] %s19
      %25 = dma.hbm_to_vmem [thread:$0]  %s0, 128, %s20, [#allocation3], 64, 64, 4
    $region5: #{tpu_custom_call.1} parent=1 // pred_fallthru
      _
    // Predicated region
    $region6: #{tpu_custom_call.1} parent=1 // pred_check
      _
    $region7: #{tpu_custom_call.1} parent=1 // pred_check_branch
      %27 = sbr.rel (0) target = $region9
    $region8: #{tpu_custom_call.1} parent=1 // pred_region
      _
    $region9: #{tpu_custom_call.1} parent=1 // pred_fallthru
      _
    // Predicated region
    $region10: #{tpu_custom_call.1} parent=1 // pred_check
      _
    $region11: #{tpu_custom_call.1} parent=1 // pred_check_branch
      %29 = sbr.rel (0) target = $region13
    $region12: #{tpu_custom_call.1} parent=1 // pred_region
      _
    $region13: #{tpu_custom_call.1} parent=1 // pred_fallthru
      _
    // Predicated region
    $region14: #{tpu_custom_call.1} parent=1 // pred_check
      _
    $region15: #{tpu_custom_call.1} parent=1 // pred_check_branch
      %31 = sbr.rel (0) target = $region17
    $region16: #{tpu_custom_call.1} parent=1 // pred_region
      _
    $region17: #{tpu_custom_call.1} parent=1 // pred_fallthru
      _
    // Predicated region
    $region18: #{tpu_custom_call.1} parent=1 // pred_check
      _
    $region19: #{tpu_custom_call.1} parent=1 // pred_check_branch
      %33 = sbr.rel (0) target = $region21
    $region20: #{tpu_custom_call.1} parent=1 // pred_region
      _
    $region21: #{tpu_custom_call.1} parent=1 // pred_fallthru
      _
    // Predicated region
    $region22: #{tpu_custom_call.1} parent=1 // pred_check
      _
    $region23: #{tpu_custom_call.1} parent=1 // pred_check_branch
      %35 = sbr.rel (0) target = $region25
    $region24: #{tpu_custom_call.1} parent=1 // pred_region
      _
    $region25: #{tpu_custom_call.1} parent=1 // pred_fallthru
      _
    // Predicated region
    $region26: #{tpu_custom_call.1} parent=1 // pred_check
      _
    $region27: #{tpu_custom_call.1} parent=1 // pred_check_branch
      %37 = sbr.rel (0) target = $region29
    $region28: #{tpu_custom_call.1} parent=1 // pred_region
      _
    $region29: #{tpu_custom_call.1} parent=1 // pred_fallthru
      _
    // Predicated region
    $region30: #{tpu_custom_call.1} parent=1 // pred_check
      _
    $region31: #{tpu_custom_call.1} parent=1 // pred_check_branch
      %39 = sbr.rel (0) target = $region33
    $region32: #{tpu_custom_call.1} parent=1 // pred_region
      %40 = dma.done [#allocation3], 128
    $region33: #{tpu_custom_call.1} parent=1 // pred_fallthru
      _
    %v42 = vld [vmem:[#allocation2] sm:$0xf]
    %v43 = vld [vmem:[#allocation2 + $0x4] sm:$0xf]
    %v44 = vld [vmem:[%s1] sm:$0xf]
    %v45 = vld [vmem:[%s1 + $0x4] sm:$0xf]
    %v46 = vld [vmem:[%s1 + $0x8] sm:$0xf]
    %v47 = vld [vmem:[%s1 + $0xc] sm:$0xf]
    %v48 = vld [vmem:[%s2] sm:$0x1]
    %v50 = vlaneseq
    %v51 = vshrl.u32 %v50, 7
    %v52 = vsub.s32 0, %v51
    %v53 = vrot.slane %v48, %v52
    %v57 = vunpack.c.l.b16 %v42
    %v58 = vunpack.c.l.b16 %v43
    %v59 = vpack.c.b16 %v58, %v57
    %v64 = vunpack.c.l.b16 %v44
    %v65 = vunpack.c.l.b16 %v45
    %v66 = vunpack.c.l.b16 %v46
    %v67 = vunpack.c.l.b16 %v47
    %v68 = vpack.c.b16 %v65, %v64
    %v69 = vpack.c.b16 %v67, %v66
    %vm72 = vcmask 261120
    %v74 = vsel %vm72, %v59, 0
    %76 = vmatprep.subr.bf16.mxu0 0
    %77 = vmatpush1.bf16.msra.mxu0 %v68
    %78 = vmatprep.subr.bf16.mxu0 0
    %79 = vmatpush1.bf16.msra.mxu0 %v69
    %80 = vmatprep.subr.bf16.mxu0 0
    %81 = vmatpush1.bf16.msra.mxu0 0
    %82 = vmatprep.subr.bf16.mxu0 0
    %83 = vmatpush1.bf16.msra.mxu0 0
    %84 = vmatprep.subr.bf16.mxu0 0
    %85 = vmatpush1.bf16.msra.mxu0 0
    %86 = vmatprep.subr.bf16.mxu0 0
    %87 = vmatpush1.bf16.msra.mxu0 0
    %88 = vmatprep.subr.bf16.mxu0 0
    %89 = vmatpush1.bf16.msra.mxu0 0
    %90 = vmatprep.subr.bf16.mxu0 0
    %91 = vmatpush1.bf16.msra.mxu0 0
    %92 = vmatprep.subr.bf16.mxu0 0
    %93 = vmatpush1.bf16.msra.mxu0 0
    %94 = vmatprep.subr.bf16.mxu0 0
    %95 = vmatpush1.bf16.msra.mxu0 0
    %96 = vmatprep.subr.bf16.mxu0 0
    %97 = vmatpush1.bf16.msra.mxu0 0
    %98 = vmatprep.subr.bf16.mxu0 0
    %99 = vmatpush1.bf16.msra.mxu0 0
    %100 = vmatprep.subr.bf16.mxu0 0
    %101 = vmatpush1.bf16.msra.mxu0 0
    %102 = vmatprep.subr.bf16.mxu0 0
    %103 = vmatpush1.bf16.msra.mxu0 0
    %104 = vmatprep.subr.bf16.mxu0 0
    %105 = vmatpush1.bf16.msra.mxu0 0
    %106 = vmatprep.subr.bf16.mxu0 0
    %107 = vmatpush1.bf16.msra.mxu0 0
    %108 = vmatprep.mubr.bf16.mxu0 0
    %109 = vmatmul.mubr.bf16.gmra.mrb[0].mxu0 %v74
    %v110 = vpop.f32.mrb[0].mxu0
    %v111 = vadd.f32 %v53, %v110
    %v112 = vpop.f32.mrb[0].mxu0
    %v113 = vpop.f32.mrb[0].mxu0
    %v114 = vadd.f32 %v53, %v113
    %v115 = vpop.f32.mrb[0].mxu0
    %116 = vdwg.mxu0
    %v117 = vmax.f32 %v111, 0.0
    %v118 = vmax.f32 %v114, 0.0
    %v119 = vpack.c.bf16 %v118, %v117
    %v120 = vld [vmem:[%s3] sm:$0xf]
    %v121 = vld [vmem:[%s3 + $0x4] sm:$0xf]
    %v122 = vld [vmem:[%s3 + $0x8] sm:$0xf]
    %v123 = vld [vmem:[%s3 + $0xc] sm:$0xf]
    %v124 = vld [vmem:[%s3 + $0x10] sm:$0xf]
    %v125 = vld [vmem:[%s3 + $0x14] sm:$0xf]
    %v126 = vld [vmem:[%s3 + $0x18] sm:$0xf]
    %v127 = vld [vmem:[%s3 + $0x1c] sm:$0xf]
    %v128 = vld [vmem:[%s4] sm:$0x1]
    %v130 = vlaneseq
    %v131 = vshrl.u32 %v130, 7
    %v132 = vsub.s32 0, %v131
    %v133 = vrot.slane %v128, %v132
    %v143 = vunpack.c.l.b16 %v120
    %v144 = vunpack.c.l.b16 %v121
    %v145 = vunpack.c.l.b16 %v122
    %v146 = vunpack.c.l.b16 %v123
    %v147 = vunpack.c.l.b16 %v124
    %v148 = vunpack.c.l.b16 %v125
    %v149 = vunpack.c.l.b16 %v126
    %v150 = vunpack.c.l.b16 %v127
    %v151 = vpack.c.b16 %v144, %v143
    %v152 = vpack.c.b16 %v146, %v145
    %v153 = vpack.c.b16 %v148, %v147
    %v154 = vpack.c.b16 %v150, %v149
    %vm159 = vcmask 523264
    %v161 = vsel %vm159, %v119, 0
    %163 = vmatprep.subr.bf16.mxu0 0
    %164 = vmatpush1.bf16.msra.mxu0 %v151
    %165 = vmatprep.subr.bf16.mxu0 0
    %166 = vmatpush1.bf16.msra.mxu0 %v152
    %167 = vmatprep.subr.bf16.mxu0 0
    %168 = vmatpush1.bf16.msra.mxu0 %v153
    %169 = vmatprep.subr.bf16.mxu0 0
    %170 = vmatpush1.bf16.msra.mxu0 %v154
    %171 = vmatprep.subr.bf16.mxu0 0
    %172 = vmatpush1.bf16.msra.mxu0 0
    %173 = vmatprep.subr.bf16.mxu0 0
    %174 = vmatpush1.bf16.msra.mxu0 0
    %175 = vmatprep.subr.bf16.mxu0 0
    %176 = vmatpush1.bf16.msra.mxu0 0
    %177 = vmatprep.subr.bf16.mxu0 0
    %178 = vmatpush1.bf16.msra.mxu0 0
    %179 = vmatprep.subr.bf16.mxu0 0
    %180 = vmatpush1.bf16.msra.mxu0 0
    %181 = vmatprep.subr.bf16.mxu0 0
    %182 = vmatpush1.bf16.msra.mxu0 0
    %183 = vmatprep.subr.bf16.mxu0 0
    %184 = vmatpush1.bf16.msra.mxu0 0
    %185 = vmatprep.subr.bf16.mxu0 0
    %186 = vmatpush1.bf16.msra.mxu0 0
    %187 = vmatprep.subr.bf16.mxu0 0
    %188 = vmatpush1.bf16.msra.mxu0 0
    %189 = vmatprep.subr.bf16.mxu0 0
    %190 = vmatpush1.bf16.msra.mxu0 0
    %191 = vmatprep.subr.bf16.mxu0 0
    %192 = vmatpush1.bf16.msra.mxu0 0
    %193 = vmatprep.subr.bf16.mxu0 0
    %194 = vmatpush1.bf16.msra.mxu0 0
    %195 = vmatprep.mubr.bf16.mxu0 0
    %196 = vmatmul.mubr.bf16.gmra.mrb[0].mxu0 %v161
    %v197 = vpop.f32.mrb[0].mxu0
    %v198 = vadd.f32 %v133, %v197
    %v199 = vpop.f32.mrb[0].mxu0
    %v200 = vpop.f32.mrb[0].mxu0
    %v201 = vadd.f32 %v133, %v200
    %v202 = vpop.f32.mrb[0].mxu0
    %203 = vdwg.mxu0
    %v204 = vmax.f32 %v198, 0.0
    %v205 = vmax.f32 %v201, 0.0
    %v206 = vpack.c.bf16 %v205, %v204
    %v207 = vld [vmem:[%s5] sm:$0xf]
    %v208 = vld [vmem:[%s5 + $0x4] sm:$0xf]
    %v209 = vld [vmem:[%s5 + $0x8] sm:$0xf]
    %v210 = vld [vmem:[%s5 + $0xc] sm:$0xf]
    %v211 = vld [vmem:[%s5 + $0x10] sm:$0xf]
    %v212 = vld [vmem:[%s5 + $0x14] sm:$0xf]
    %v213 = vld [vmem:[%s5 + $0x18] sm:$0xf]
    %v214 = vld [vmem:[%s5 + $0x1c] sm:$0xf]
    %v215 = vld [vmem:[%s6] sm:$0x1]
    %v217 = vlaneseq
    %v218 = vshrl.u32 %v217, 7
    %v219 = vsub.s32 0, %v218
    %v220 = vrot.slane %v215, %v219
    %v230 = vunpack.c.l.b16 %v207
    %v231 = vunpack.c.l.b16 %v208
    %v232 = vunpack.c.l.b16 %v209
    %v233 = vunpack.c.l.b16 %v210
    %v234 = vunpack.c.l.b16 %v211
    %v235 = vunpack.c.l.b16 %v212
    %v236 = vunpack.c.l.b16 %v213
    %v237 = vunpack.c.l.b16 %v214
    %v238 = vpack.c.b16 %v231, %v230
    %v239 = vpack.c.b16 %v233, %v232
    %v240 = vpack.c.b16 %v235, %v234
    %v241 = vpack.c.b16 %v237, %v236
    %v247 = vsel %vm159, %v206, 0
    %249 = vmatprep.subr.bf16.mxu0 0
    %250 = vmatpush1.bf16.msra.mxu0 %v238
    %251 = vmatprep.subr.bf16.mxu0 0
    %252 = vmatpush1.bf16.msra.mxu0 %v239
    %253 = vmatprep.subr.bf16.mxu0 0
    %254 = vmatpush1.bf16.msra.mxu0 %v240
    %255 = vmatprep.subr.bf16.mxu0 0
    %256 = vmatpush1.bf16.msra.mxu0 %v241
    %257 = vmatprep.subr.bf16.mxu0 0
    %258 = vmatpush1.bf16.msra.mxu0 0
    %259 = vmatprep.subr.bf16.mxu0 0
    %260 = vmatpush1.bf16.msra.mxu0 0
    %261 = vmatprep.subr.bf16.mxu0 0
    %262 = vmatpush1.bf16.msra.mxu0 0
    %263 = vmatprep.subr.bf16.mxu0 0
    %264 = vmatpush1.bf16.msra.mxu0 0
    %265 = vmatprep.subr.bf16.mxu0 0
    %266 = vmatpush1.bf16.msra.mxu0 0
    %267 = vmatprep.subr.bf16.mxu0 0
    %268 = vmatpush1.bf16.msra.mxu0 0
    %269 = vmatprep.subr.bf16.mxu0 0
    %270 = vmatpush1.bf16.msra.mxu0 0
    %271 = vmatprep.subr.bf16.mxu0 0
    %272 = vmatpush1.bf16.msra.mxu0 0
    %273 = vmatprep.subr.bf16.mxu0 0
    %274 = vmatpush1.bf16.msra.mxu0 0
    %275 = vmatprep.subr.bf16.mxu0 0
    %276 = vmatpush1.bf16.msra.mxu0 0
    %277 = vmatprep.subr.bf16.mxu0 0
    %278 = vmatpush1.bf16.msra.mxu0 0
    %279 = vmatprep.subr.bf16.mxu0 0
    %280 = vmatpush1.bf16.msra.mxu0 0
    %281 = vmatprep.mubr.bf16.mxu0 0
    %282 = vmatmul.mubr.bf16.gmra.mrb[0].mxu0 %v247
    %v283 = vpop.f32.mrb[0].mxu0
    %v284 = vadd.f32 %v220, %v283
    %v285 = vpop.f32.mrb[0].mxu0
    %v286 = vpop.f32.mrb[0].mxu0
    %v287 = vadd.f32 %v220, %v286
    %v288 = vpop.f32.mrb[0].mxu0
    %289 = vdwg.mxu0
    %vm290 = vcmask 130048
    %291 = vst.msk [vmem:[#allocation5] sm:$0xff] %vm290, %v284
    %292 = vst.msk [vmem:[#allocation5 + $0x8] sm:$0xff] %vm290, %v287
    // Predicated region
    $region34: #{tpu_custom_call.1} parent=1 // pred_check
      _
    $region35: #{tpu_custom_call.1} parent=1 // pred_check_branch
      %294 = sbr.rel (0) target = $region37
    $region36: #{tpu_custom_call.1} parent=1 // pred_region
      %s296 = ssub.s32 256, 256
      %297 = vsyncadd [#allocation4], %s296
      %s298 = sshll.u32 [#allocation5], 4
      %s299 = int_to_ptr.vmem [resolvable:$true] %s298
      %304 = dma.vmem_to_hbm [thread:$0]  %s299, 256, %s7, [#allocation4], 128, 128, 8
    $region37: #{tpu_custom_call.1} parent=1 // pred_fallthru
      _
    // Predicated region
    $region38: #{tpu_custom_call.1} parent=1 // pred_check
      _
    $region39: #{tpu_custom_call.1} parent=1 // pred_check_branch
      %306 = sbr.rel (0) target = $region41
    $region40: #{tpu_custom_call.1} parent=1 // pred_region
      %307 = dma.done [#allocation4], 256
    $region41: #{tpu_custom_call.1} parent=1 // pred_fallthru
      _
    %308 = vsyncpa [#allocation3], 1
    %309 = vsyncpa [#allocation4], 1

</llo_original>
